<compile_context>
chip_gen: v5e
topology: v5e:2x2
jax: 0.10.0
libtpu: 0.0.40
codegen_flags: <defaults>
</compile_context>

<pallas_src>
import functools
import math

import numpy as np
import jax
import jax.numpy as jnp
from jax.experimental import pallas as pl
from jax.experimental.pallas import tpu as pltpu

LEAKY_SLOPE = 0.01               # nn.LeakyReLU() default
CHANS = [16, 24, 32, 96, 160]    # FeatUp channel widths
MAX_TM = 512                     # max row tile for the matmul grid
BN_EPS = 1e-5


def _round_up(x, m):
    return ((x + m - 1) // m) * m


# --------------------------- Pallas kernel -----------------------------------
# Single fused kernel for every conv in the module:
#   out = LeakyReLU( A @ W + bias )
# A = im2col patches (bf16), W = conv weight with BN scale folded in (bf16),
# bias = folded BN bias (f32).  MXU matmul, f32 accumulate, VPU epilogue.

def _matmul_bias_act_kernel(a_ref, w_ref, b_ref, o_ref, *, act):
    acc = jnp.dot(a_ref[...], w_ref[...], preferred_element_type=jnp.float32)
    y = acc + b_ref[...]
    if act == "leaky":
        y = jnp.where(y >= 0.0, y, y * LEAKY_SLOPE)
    o_ref[...] = y.astype(o_ref.dtype)


@functools.lru_cache(maxsize=None)
def _build_matmul(Mp, K, N, TM, act, out_dtype_name):
    out_dtype = jnp.dtype(out_dtype_name)
    return pl.pallas_call(
        functools.partial(_matmul_bias_act_kernel, act=act),
        out_shape=jax.ShapeDtypeStruct((Mp, N), out_dtype),
        grid=(Mp // TM,),
        in_specs=[
            pl.BlockSpec((TM, K), lambda i: (i, 0)),   # patch row-tile
            pl.BlockSpec((K, N), lambda i: (0, 0)),    # folded weight (resident)
            pl.BlockSpec((1, N), lambda i: (0, 0)),    # folded BN bias
        ],
        out_specs=pl.BlockSpec((TM, N), lambda i: (i, 0)),
        compiler_params=pltpu.CompilerParams(dimension_semantics=("parallel",)),
    )


def matmul_fused(a_bf16, w_bf16, bias_f32, act="leaky", out_dtype=jnp.bfloat16):
    """LeakyReLU(a @ w + bias); rows tiled over a 1-D Pallas grid, true K/N (no padding)."""
    M, K = a_bf16.shape
    Kw, N = w_bf16.shape
    assert K == Kw and bias_f32.shape == (1, N)
    TM = min(MAX_TM, _round_up(M, 16))          # 16-row multiples (bf16 sublane pack)
    Mp = _round_up(M, TM)
    if Mp != M:
        a_bf16 = jnp.pad(a_bf16, ((0, Mp - M), (0, 0)))
    fn = _build_matmul(Mp, K, N, TM, act, jnp.dtype(out_dtype).name)
    out = fn(a_bf16, w_bf16, bias_f32)
    return out if Mp == M else out[:M]


# --------------------------- conv glue (im2col) --------------------------------

def _im2col3(x):
    """3x3 / stride-1 / pad-1 im2col.  x: (B,H,W,C) -> (B*H*W, 9*C),
    patch ordering (kh, kw, cin) matching the (3,3,Cin,Cout) weight reshape."""
    B, H, W, C = x.shape
    xp = jnp.pad(x, ((0, 0), (1, 1), (1, 1), (0, 0)))
    cols = [xp[:, i:i + H, j:j + W, :] for i in range(3) for j in range(3)]
    patches = jnp.stack(cols, axis=3)                       # (B, H, W, 9, C)
    return patches.reshape(B * H * W, 9 * C)


def conv3x3_bn_lrelu(x, w_flat, bias):
    """Conv2d(3x3,s1,p1,bias=False) + BatchNorm(folded) + LeakyReLU -> one Pallas call."""
    B, H, W, _ = x.shape
    out = matmul_fused(_im2col3(x), w_flat, bias)
    return out.reshape(B, H, W, -1)


def deconv4x4s2_bn_lrelu(x, w_packed, bias4):
    """ConvTranspose2d(4x4,s2,p1,bias=False) + BN(folded) + LeakyReLU -> one Pallas call.
    The 4 sub-pixel output phases are packed side-by-side in the weight columns
    (N = 4*Cout) over a shared 3x3/pad-1 patch matrix, then interleaved back to
    (2H, 2W) with a reshape/transpose (layout plumbing only)."""
    B, H, W, _ = x.shape
    cout = w_packed.shape[1] // 4
    out = matmul_fused(_im2col3(x), w_packed, bias4)        # (B*H*W, 4*cout)
    out = out.reshape(B, H, W, 2, 2, cout)                  # (..., row-phase, col-phase, c)
    return jnp.transpose(out, (0, 1, 3, 2, 4, 5)).reshape(B, 2 * H, 2 * W, cout)


def _interp_nearest(x, Ho, Wo):
    """F.interpolate(mode='nearest') for the rare shape-mismatch branch of Conv2x."""
    iy = jnp.arange(Ho) * x.shape[1] // Ho
    ix = jnp.arange(Wo) * x.shape[2] // Wo
    return x[:, iy][:, :, ix]


def conv2x_fwd(p, x, rem):
    """Conv2x(deconv=True, concat=True).forward(x, rem)."""
    u = deconv4x4s2_bn_lrelu(x, p["w1"], p["b1"])           # conv1: deconv + BN + LeakyReLU
    if u.shape[1:3] != rem.shape[1:3]:
        u = _interp_nearest(u, rem.shape[1], rem.shape[2])
    cat = jnp.concatenate([u, rem], axis=-1)                # torch.cat((x, rem), 1)
    return conv3x3_bn_lrelu(cat, p["w2"], p["b2"])          # conv2: conv + BN + LeakyReLU


# --------------------------- parameters ---------------------------------------

class _KeyGen:
    def __init__(self, seed=0):
        self._base = jax.random.PRNGKey(seed)
        self._i = 0

    def __call__(self):
        self._i += 1
        return jax.random.fold_in(self._base, self._i)


def _conv_w(kg, cin, cout, k=3):
    # SubModule.weight_init: normal(0, sqrt(2 / (k*k*cout))), HWIO layout
    return math.sqrt(2.0 / (k * k * cout)) * jax.random.normal(
        kg(), (k, k, cin, cout), jnp.float32)


def _deconvT_w(kg, cin, cout, k=4):
    # PyTorch ConvTranspose2d weight layout: (Cin, Cout, kH, kW)
    return math.sqrt(2.0 / (k * k * cout)) * jax.random.normal(
        kg(), (cin, cout, k, k), jnp.float32)


def _bn(kg, c):
    # inference-mode BatchNorm2d affine params + running stats
    return dict(
        gamma=1.0 + 0.05 * jax.random.normal(kg(), (c,), jnp.float32),
        beta=0.05 * jax.random.normal(kg(), (c,), jnp.float32),
        mean=0.05 * jax.random.normal(kg(), (c,), jnp.float32),
        var=1.0 + 0.05 * jnp.abs(jax.random.normal(kg(), (c,), jnp.float32)),
    )


def _bn_scale_bias(bn):
    s = bn["gamma"] / jnp.sqrt(bn["var"] + BN_EPS)
    return s, bn["beta"] - bn["mean"] * s


def _fold_conv(w_hwio, bn):
    """Fold BN scale into the conv weight columns; pre-cast once (bf16 W, f32 bias)."""
    s, b = _bn_scale_bias(bn)
    kh, kw, cin, cout = w_hwio.shape
    wf = (w_hwio * s[None, None, None, :]).reshape(kh * kw * cin, cout)
    return wf.astype(jnp.bfloat16), b.reshape(1, cout).astype(jnp.float32)


def _fold_deconv(wt, bn):
    """ConvTranspose2d(4,s2,p1) -> packed 3x3-conv weight (9*Cin, 4*Cout).
    Output sub-pixel phase (a,b) = (row%2, col%2) occupies columns
    [(2a+b)*Cout : (2a+b+1)*Cout]; its 2x2 taps use kernel index (3-a-2dy, 3-b-2dx)
    at patch position (a+dy, b+dx).  BN scale folded in, BN bias tiled x4."""
    cin, cout = wt.shape[0], wt.shape[1]
    s, b = _bn_scale_bias(bn)
    wt_np = np.asarray(wt)
    wp = np.zeros((3, 3, cin, 2, 2, cout), np.float32)
    for a in range(2):
        for bb in range(2):
            for dy in range(2):
                for dx in range(2):
                    ky, kx = 3 - a - 2 * dy, 3 - bb - 2 * dx
                    wp[a + dy, bb + dx, :, a, bb, :] = wt_np[:, :, ky, kx]
    wp = jnp.asarray(wp) * s[None, None, None, None, None, :]
    wp = wp.reshape(9 * cin, 4 * cout).astype(jnp.bfloat16)
    bias4 = jnp.tile(b, 4).reshape(1, 4 * cout).astype(jnp.float32)
    return wp, bias4


def _make_conv2x(kg, cin, cout):
    # Conv2x(cin, cout, deconv=True, concat=True):
    #   conv1 = ConvTranspose2d(cin, cout, 4, s2, p1, bias=False) + BN + LeakyReLU
    #   conv2 = Conv2d(2*cout, 2*cout, 3, s1, p1, bias=False)     + BN + LeakyReLU
    w1, b1 = _fold_deconv(_deconvT_w(kg, cin, cout), _bn(kg, cout))
    w2, b2 = _fold_conv(_conv_w(kg, 2 * cout, 2 * cout), _bn(kg, 2 * cout))
    return dict(w1=w1, b1=b1, w2=w2, b2=b2)


def init_params(seed=0):
    kg = _KeyGen(seed)
    c = CHANS
    params = {
        "deconv8_4": _make_conv2x(kg, c[4], c[3]),        # 160 -> 96, concat -> conv 192
        "deconv4_2": _make_conv2x(kg, c[3] * 2, c[2]),    # 192 -> 32, concat -> conv 64
        "deconv2_1": _make_conv2x(kg, c[2] * 2, c[0]),    # 64  -> 16, concat -> conv 32
    }
    w4, b4 = _fold_conv(_conv_w(kg, c[0] * 2, c[0] * 2), _bn(kg, c[0] * 2))
    params["conv4_w"], params["conv4_b"] = w4, b4          # BasicConv(32, 32, 3, s1, p1)
    return params


# --------------------------- forward -------------------------------------------

def featup_forward(params, featL, featR):
    """FeatUp.forward.  featL / featR: tuples (x, x2, x4, x8) in NCHW.
    The L and R pyramids share weights, so both sides are stacked along batch and
    the entire network runs in 7 fused Pallas matmul calls."""
    B = featL[0].shape[0]

    def to_nhwc_pair(l, r):
        z = jnp.concatenate([l, r], axis=0)
        return jnp.transpose(z, (0, 2, 3, 1)).astype(jnp.bfloat16)

    z, z2, z4, z8 = (to_nhwc_pair(l, r) for l, r in zip(featL, featR))

    z4n = conv2x_fwd(params["deconv8_4"], z8, z4)          # x4 = deconv8_4(x8, x4)
    z2n = conv2x_fwd(params["deconv4_2"], z4n, z2)         # x2 = deconv4_2(x4, x2)
    zn = conv2x_fwd(params["deconv2_1"], z2n, z)           # x  = deconv2_1(x2, x)
    zn = conv3x3_bn_lrelu(zn, params["conv4_w"], params["conv4_b"])   # x = conv4(x)

    def split_nchw(t):
        t = jnp.transpose(t, (0, 3, 1, 2)).astype(jnp.float32)
        return t[:B], t[B:]

    x_o, y_o = split_nchw(zn)
    x2_o, y2_o = split_nchw(z2n)
    x4_o, y4_o = split_nchw(z4n)
    return ([x_o, x2_o, x4_o, featL[3]], [y_o, y2_o, y4_o, featR[3]])


# --------------------------- reference self-check ------------------------------

def _leaky(y):
    return jnp.where(y >= 0.0, y, LEAKY_SLOPE * y)


def _ref_conv3x3(x, w_hwio, bn):
    y = jax.lax.conv_general_dilated(
        x, w_hwio, window_strides=(1, 1), padding=((1, 1), (1, 1)),
        dimension_numbers=("NHWC", "HWIO", "NHWC"))
    s, b = _bn_scale_bias(bn)
    return _leaky(y * s + b)


def _ref_deconv4x4s2(x, wt, bn):
    # ConvTranspose2d(4, s2, p1) == dilate-by-2 input, pad 2, correlate with flipped kernel
    w = jnp.transpose(wt, (2, 3, 0, 1))[::-1, ::-1]        # (kh, kw, Cin, Cout), flipped
    y = jax.lax.conv_general_dilated(
        x, w, window_strides=(1, 1), padding=((2, 2), (2, 2)),
        lhs_dilation=(2, 2), dimension_numbers=("NHWC", "HWIO", "NHWC"))
    s, b = _bn_scale_bias(bn)
    return _leaky(y * s + b)


def _self_check():
    """Validate BN folding, deconv phase packing and the fused Pallas matmul kernel."""
    kg = _KeyGen(123)
    B, H, W = 2, 8, 8

    # 3x3 conv + BN + LeakyReLU
    cin, cout = 24, 32
    w = _conv_w(kg, cin, cout)
    bn = _bn(kg, cout)
    x = jax.random.normal(kg(), (B, H, W, cin), jnp.float32).astype(jnp.bfloat16)
    wf, bias = _fold_conv(w, bn)
    got = conv3x3_bn_lrelu(x, wf, bias).astype(jnp.float32)
    want = _ref_conv3x3(x.astype(jnp.float32), w, bn)
    err = float(jnp.max(jnp.abs(got - want)) / (jnp.max(jnp.abs(want)) + 1e-6))
    assert err < 3e-2, f"conv3x3 mismatch: rel err {err}"

    # 4x4/s2 deconv + BN + LeakyReLU (phase packing)
    cin, cout = 32, 16
    wt = _deconvT_w(kg, cin, cout)
    bn = _bn(kg, cout)
    x = jax.random.normal(kg(), (B, H, W, cin), jnp.float32).astype(jnp.bfloat16)
    wp, bias4 = _fold_deconv(wt, bn)
    got = deconv4x4s2_bn_lrelu(x, wp, bias4).astype(jnp.float32)
    want = _ref_deconv4x4s2(x.astype(jnp.float32), wt, bn)
    err = float(jnp.max(jnp.abs(got - want)) / (jnp.max(jnp.abs(want)) + 1e-6))
    assert err < 3e-2, f"deconv4x4s2 mismatch: rel err {err}"


# --------------------------- demo ----------------------------------------------

if __name__ == "__main__":
    _self_check()

    params = init_params(seed=0)
    key = jax.random.PRNGKey(0)
    keys = jax.random.split(key, 8)
    B = 2
    shapes = [(B, 16, 32, 32), (B, 32, 16, 16), (B, 96, 8, 8), (B, 160, 4, 4)]
    featL = tuple(jax.random.normal(k, s, jnp.float32) for k, s in zip(keys[:4], shapes))
    featR = tuple(jax.random.normal(k, s, jnp.float32) for k, s in zip(keys[4:], shapes))

    fwd = jax.jit(featup_forward)
    outL, outR = jax.block_until_ready(fwd(params, featL, featR))

    assert outL[0].shape == (B, 32, 32, 32), outL[0].shape
    assert outL[1].shape == (B, 64, 16, 16), outL[1].shape
    assert outL[2].shape == (B, 192, 8, 8), outL[2].shape
    assert outL[3].shape == (B, 160, 4, 4), outL[3].shape
    assert outR[0].shape == (B, 32, 32, 32), outR[0].shape
    assert all(bool(jnp.all(jnp.isfinite(t))) for t in outL + outR)
    print("KERNEL_OK")
</pallas_src>

<mosaic_0001>
module attributes {stable_mosaic.version = 11 : i64} {
  func.func @_matmul_bias_act_kernel(%arg0: i32, %arg1: memref<128x216xbf16, #tpu.memory_space<vmem>>, %arg2: memref<216x32xbf16, #tpu.memory_space<vmem>>, %arg3: memref<1x32xf32, #tpu.memory_space<vmem>>, %arg4: memref<128x32xbf16, #tpu.memory_space<vmem>>) attributes {dimension_semantics = [#tpu.dimension_semantics<parallel>], iteration_bounds = array<i64: 1>, scalar_prefetch = 0 : i64, scratch_operands = 0 : i64, tpu.core_type = #tpu.core_type<tc>, window_params = [{transform_indices = @transform_0, window_bounds = array<i64: 128, 216>}, {pipeline_mode = #tpu.pipeline_mode<synchronous>, transform_indices = @transform_1, window_bounds = array<i64: 216, 32>}, {pipeline_mode = #tpu.pipeline_mode<synchronous>, transform_indices = @transform_2, window_bounds = array<i64: 1, 32>}, {transform_indices = @transform_3, window_bounds = array<i64: 128, 32>}]} {
    %c0 = arith.constant 0 : index
    %c0_0 = arith.constant 0 : index
    %0 = vector.load %arg1[%c0, %c0_0] : memref<128x216xbf16, #tpu.memory_space<vmem>>, vector<128x216xbf16>
    %c0_1 = arith.constant 0 : index
    %c0_2 = arith.constant 0 : index
    %1 = vector.load %arg2[%c0_1, %c0_2] : memref<216x32xbf16, #tpu.memory_space<vmem>>, vector<216x32xbf16>
    %cst = arith.constant dense<0.000000e+00> : vector<128x32xf32>
    %2 = tpu.matmul %0, %1, %cst {dimension_numbers = #tpu.dot_dimension_numbers<[1], [0], [0], [1], [0, 0, 1, 1], [], []>} : vector<128x216xbf16>, vector<216x32xbf16>, vector<128x32xf32> -> vector<128x32xf32>
    %c0_3 = arith.constant 0 : index
    %c0_4 = arith.constant 0 : index
    %3 = vector.load %arg3[%c0_3, %c0_4] : memref<1x32xf32, #tpu.memory_space<vmem>>, vector<1x32xf32>
    %4 = vector.broadcast %3 : vector<1x32xf32> to vector<128x32xf32>
    %5 = arith.addf %2, %4 : vector<128x32xf32>
    %cst_5 = arith.constant 0.000000e+00 : f32
    %6 = vector.broadcast %cst_5 : f32 to vector<128x32xf32>
    %7 = arith.cmpf oge, %5, %6 : vector<128x32xf32>
    %cst_6 = arith.constant 0.00999999977 : f32
    %8 = vector.broadcast %cst_6 : f32 to vector<128x32xf32>
    %9 = arith.mulf %5, %8 : vector<128x32xf32>
    %10 = arith.select %7, %5, %9 : vector<128x32xi1>, vector<128x32xf32>
    %11 = arith.truncf %10 : vector<128x32xf32> to vector<128x32xbf16>
    %c0_7 = arith.constant 0 : index
    %c0_8 = arith.constant 0 : index
    %12 = vector.load %arg4[%c0_7, %c0_8] : memref<128x32xbf16, #tpu.memory_space<vmem>>, vector<128x32xbf16>
    tpu.vector_store %arg4[%c0_7, %c0_8], %11 {strides = array<i32>} : memref<128x32xbf16, #tpu.memory_space<vmem>>, vector<128x32xbf16>,
    return
  }
  func.func @transform_0(%arg0: i32) -> (i32, i32) {
    %c0_i32 = arith.constant 0 : i32
    %c0_i32_0 = arith.constant 0 : i32
    return %arg0, %c0_i32 : i32, i32
  }
  func.func @transform_1(%arg0: i32) -> (i32, i32) {
    %c0_i32 = arith.constant 0 : i32
    %c0_i32_0 = arith.constant 0 : i32
    %c0_i32_1 = arith.constant 0 : i32
    return %c0_i32, %c0_i32_0 : i32, i32
  }
  func.func @transform_2(%arg0: i32) -> (i32, i32) {
    %c0_i32 = arith.constant 0 : i32
    %c0_i32_0 = arith.constant 0 : i32
    %c0_i32_1 = arith.constant 0 : i32
    return %c0_i32, %c0_i32_0 : i32, i32
  }
  func.func @transform_3(%arg0: i32) -> (i32, i32) {
    %c0_i32 = arith.constant 0 : i32
    %c0_i32_0 = arith.constant 0 : i32
    return %arg0, %c0_i32 : i32, i32
  }
}

</mosaic_0001>

<llo_original>
// kernel: tpu_custom_call.1
$region0: #{tpu_custom_call.1}
  #allocation0 [shape = 'u32[]', space=smem, size = 0x4, offset = 0x4, fixed_abs, tag = 'smem constant byte address 0x4 - core index']
  #allocation1 [shape = 'u32[72,128]{1,0:T(1,128)}', space=vmem, size = 0x9000, scoped, tag = 'internal scratch']
  %s0 = inlined_call_operand.vmem [shape: bf16[128,216], index: 0, kind: input, shape index: {}]
  %s1 = inlined_call_operand.vmem [shape: bf16[216,32], index: 1, kind: input, shape index: {}]
  %s2 = inlined_call_operand.vmem [shape: f32[1,32], index: 2, kind: input, shape index: {}]
  %s3 = inlined_call_operand.vmem [shape: bf16[128,32], index: 3, kind: output, shape index: {}]
  %s4 = sld [smem:[#allocation0]]
  $region22: #{tpu_custom_call.1} parent=0
    _
  %s6 = ssub.s32 1, %s4
  %s7 = scalar_select 0, %s6, %s4
  // Predicated region
  $region2: #{tpu_custom_call.1} parent=0 // pred_check
    _
  $region3: #{tpu_custom_call.1} parent=0 // pred_check_branch
    %9 = sbr.rel (0) target = $region5
  $region4: #{tpu_custom_call.1} parent=0 // pred_region
    _
  $region5: #{tpu_custom_call.1} parent=0 // pred_fallthru
    _
  // Predicated region
  $region6: #{tpu_custom_call.1} parent=0 // pred_check
    _
  $region7: #{tpu_custom_call.1} parent=0 // pred_check_branch
    %11 = sbr.rel (0) target = $region9
  $region8: #{tpu_custom_call.1} parent=0 // pred_region
    _
  $region9: #{tpu_custom_call.1} parent=0 // pred_fallthru
    _
  // Predicated region
  $region10: #{tpu_custom_call.1} parent=0 // pred_check
    _
  $region11: #{tpu_custom_call.1} parent=0 // pred_check_branch
    %13 = sbr.rel (0) target = $region13
  $region12: #{tpu_custom_call.1} parent=0 // pred_region
    _
  $region13: #{tpu_custom_call.1} parent=0 // pred_fallthru
    _
  %v15 = vld [vmem:[%s0] sm:$0xff]
  %v16 = vld [vmem:[%s0 + $0x8] sm:$0xff]
  %v17 = vld [vmem:[%s0 + $0x10] sm:$0xff]
  %v18 = vld [vmem:[%s0 + $0x18] sm:$0xff]
  %v19 = vld [vmem:[%s0 + $0x20] sm:$0xff]
  %v20 = vld [vmem:[%s0 + $0x28] sm:$0xff]
  %v21 = vld [vmem:[%s0 + $0x30] sm:$0xff]
  %v22 = vld [vmem:[%s0 + $0x38] sm:$0xff]
  %v23 = vld [vmem:[%s0 + $0x40] sm:$0xff]
  %v24 = vld [vmem:[%s0 + $0x48] sm:$0xff]
  %v25 = vld [vmem:[%s0 + $0x50] sm:$0xff]
  %v26 = vld [vmem:[%s0 + $0x58] sm:$0xff]
  %v27 = vld [vmem:[%s0 + $0x60] sm:$0xff]
  %v28 = vld [vmem:[%s0 + $0x68] sm:$0xff]
  %v29 = vld [vmem:[%s0 + $0x70] sm:$0xff]
  %v30 = vld [vmem:[%s0 + $0x78] sm:$0xff]
  %v31 = vld [vmem:[%s1] sm:$0xf]
  %v32 = vld [vmem:[%s1 + $0x4] sm:$0xf]
  %v33 = vld [vmem:[%s1 + $0x8] sm:$0xf]
  %v34 = vld [vmem:[%s1 + $0xc] sm:$0xf]
  %v35 = vld [vmem:[%s1 + $0x10] sm:$0xf]
  %v36 = vld [vmem:[%s1 + $0x14] sm:$0xf]
  %v37 = vld [vmem:[%s1 + $0x18] sm:$0xf]
  %v38 = vld [vmem:[%s1 + $0x1c] sm:$0xf]
  %v39 = vld [vmem:[%s1 + $0x20] sm:$0xf]
  %v40 = vld [vmem:[%s1 + $0x24] sm:$0xf]
  %v41 = vld [vmem:[%s1 + $0x28] sm:$0xf]
  %v42 = vld [vmem:[%s1 + $0x2c] sm:$0xf]
  %v43 = vld [vmem:[%s1 + $0x30] sm:$0xf]
  %v44 = vld [vmem:[%s1 + $0x34] sm:$0xf]
  %v45 = vld [vmem:[%s1 + $0x38] sm:$0xf]
  %v46 = vld [vmem:[%s1 + $0x3c] sm:$0xf]
  %v47 = vld [vmem:[%s1 + $0x40] sm:$0xf]
  %v48 = vld [vmem:[%s1 + $0x44] sm:$0xf]
  %v49 = vld [vmem:[%s1 + $0x48] sm:$0xf]
  %v50 = vld [vmem:[%s1 + $0x4c] sm:$0xf]
  %v51 = vld [vmem:[%s1 + $0x50] sm:$0xf]
  %v52 = vld [vmem:[%s1 + $0x54] sm:$0xf]
  %v53 = vld [vmem:[%s1 + $0x58] sm:$0xf]
  %v54 = vld [vmem:[%s1 + $0x5c] sm:$0xf]
  %v55 = vld [vmem:[%s1 + $0x60] sm:$0xf]
  %v56 = vld [vmem:[%s1 + $0x64] sm:$0xf]
  %v57 = vld [vmem:[%s1 + $0x68] sm:$0xf]
  %v58 = vld [vmem:[%s2] sm:$0x1]
  %v60 = vperm.slane %v58, 0
  %v78 = vunpack.c.l.b16 %v15
  %v79 = vunpack.c.h.b16 %v15
  %v80 = vunpack.c.l.b16 %v16
  %v81 = vunpack.c.h.b16 %v16
  %v82 = vunpack.c.l.b16 %v17
  %v83 = vunpack.c.h.b16 %v17
  %v84 = vunpack.c.l.b16 %v18
  %v85 = vunpack.c.h.b16 %v18
  %v86 = vunpack.c.l.b16 %v19
  %v87 = vunpack.c.h.b16 %v19
  %v88 = vunpack.c.l.b16 %v20
  %v89 = vunpack.c.h.b16 %v20
  %v90 = vunpack.c.l.b16 %v21
  %v91 = vunpack.c.h.b16 %v21
  %v92 = vunpack.c.l.b16 %v22
  %v93 = vunpack.c.h.b16 %v22
  %v94 = vunpack.c.l.b16 %v23
  %v95 = vunpack.c.h.b16 %v23
  %v96 = vunpack.c.l.b16 %v24
  %v97 = vunpack.c.h.b16 %v24
  %v98 = vunpack.c.l.b16 %v25
  %v99 = vunpack.c.h.b16 %v25
  %v100 = vunpack.c.l.b16 %v26
  %v101 = vunpack.c.h.b16 %v26
  %v102 = vunpack.c.l.b16 %v27
  %v103 = vunpack.c.h.b16 %v27
  %v104 = vunpack.c.l.b16 %v28
  %v105 = vunpack.c.h.b16 %v28
  %v106 = vunpack.c.l.b16 %v29
  %v107 = vunpack.c.h.b16 %v29
  %v108 = vunpack.c.l.b16 %v30
  %v109 = vunpack.c.h.b16 %v30
  %v110 = vpack.c.b16 %v80, %v78
  %v111 = vpack.c.b16 %v81, %v79
  %v112 = vpack.c.b16 %v84, %v82
  %v113 = vpack.c.b16 %v85, %v83
  %v114 = vpack.c.b16 %v88, %v86
  %v115 = vpack.c.b16 %v89, %v87
  %v116 = vpack.c.b16 %v92, %v90
  %v117 = vpack.c.b16 %v93, %v91
  %v118 = vpack.c.b16 %v96, %v94
  %v119 = vpack.c.b16 %v97, %v95
  %v120 = vpack.c.b16 %v100, %v98
  %v121 = vpack.c.b16 %v101, %v99
  %v122 = vpack.c.b16 %v104, %v102
  %v123 = vpack.c.b16 %v105, %v103
  %v124 = vpack.c.b16 %v108, %v106
  %v125 = vpack.c.b16 %v109, %v107
  %v161 = vunpack.c.l.b16 %v31
  %v162 = vunpack.c.l.b16 %v32
  %v163 = vunpack.c.l.b16 %v33
  %v164 = vunpack.c.l.b16 %v34
  %v165 = vunpack.c.l.b16 %v35
  %v166 = vunpack.c.l.b16 %v36
  %v167 = vunpack.c.l.b16 %v37
  %v168 = vunpack.c.l.b16 %v38
  %v169 = vunpack.c.l.b16 %v39
  %v170 = vunpack.c.l.b16 %v40
  %v171 = vunpack.c.l.b16 %v41
  %v172 = vunpack.c.l.b16 %v42
  %v173 = vunpack.c.l.b16 %v43
  %v174 = vunpack.c.l.b16 %v44
  %v175 = vunpack.c.l.b16 %v45
  %v176 = vunpack.c.l.b16 %v46
  %v177 = vunpack.c.l.b16 %v47
  %v178 = vunpack.c.l.b16 %v48
  %v179 = vunpack.c.l.b16 %v49
  %v180 = vunpack.c.l.b16 %v50
  %v181 = vunpack.c.l.b16 %v51
  %v182 = vunpack.c.l.b16 %v52
  %v183 = vunpack.c.l.b16 %v53
  %v184 = vunpack.c.l.b16 %v54
  %v185 = vunpack.c.l.b16 %v55
  %v186 = vunpack.c.l.b16 %v56
  %v187 = vunpack.c.l.b16 %v57
  %v188 = vpack.c.b16 %v162, %v161
  %v189 = vpack.c.b16 %v164, %v163
  %v190 = vpack.c.b16 %v166, %v165
  %v191 = vpack.c.b16 %v168, %v167
  %v192 = vpack.c.b16 %v170, %v169
  %v193 = vpack.c.b16 %v172, %v171
  %v194 = vpack.c.b16 %v174, %v173
  %v195 = vpack.c.b16 %v176, %v175
  %v196 = vpack.c.b16 %v178, %v177
  %v197 = vpack.c.b16 %v180, %v179
  %v198 = vpack.c.b16 %v182, %v181
  %v199 = vpack.c.b16 %v184, %v183
  %v200 = vpack.c.b16 %v186, %v185
  %v201 = vpack.c.b16 %v187, %v187
  %vm215 = vcmask 719872
  %v217 = vsel %vm215, %v111, 0
  %v220 = vsel %vm215, %v113, 0
  %v223 = vsel %vm215, %v115, 0
  %v226 = vsel %vm215, %v117, 0
  %v229 = vsel %vm215, %v119, 0
  %v232 = vsel %vm215, %v121, 0
  %v235 = vsel %vm215, %v123, 0
  %v238 = vsel %vm215, %v125, 0
  %vm240 = vcmask 1043456
  %v242 = vsel %vm240, %v201, 0
  %244 = vmatpush.bf16.msra.mxu0 %v195
  %245 = vmatpush.bf16.msra.mxu0 %v194
  %246 = vmatpush.bf16.msra.mxu0 %v193
  %247 = vmatpush.bf16.msra.mxu0 %v192
  %248 = vmatpush.bf16.msra.mxu0 %v191
  %249 = vmatpush.bf16.msra.mxu0 %v190
  %250 = vmatpush.bf16.msra.mxu0 %v189
  %251 = vmatpush.bf16.msra.mxu0 %v188
  %252 = vmatmul.bf16.gmra.mxu0 %v110
  %v253 = vpop.f32.mrf.mxu0
  %v254 = vadd.f32 %v60, %v253
  %v255 = vpop.f32.mrf.mxu0
  %v256 = vadd.f32 %v60, %v255
  %257 = vmatmul.bf16.gmra.mxu0 %v112
  %v258 = vpop.f32.mrf.mxu0
  %v259 = vadd.f32 %v60, %v258
  %v260 = vpop.f32.mrf.mxu0
  %v261 = vadd.f32 %v60, %v260
  %262 = vmatmul.bf16.gmra.mxu0 %v114
  %v263 = vpop.f32.mrf.mxu0
  %v264 = vadd.f32 %v60, %v263
  %v265 = vpop.f32.mrf.mxu0
  %v266 = vadd.f32 %v60, %v265
  %267 = vmatmul.bf16.gmra.mxu0 %v116
  %v268 = vpop.f32.mrf.mxu0
  %v269 = vadd.f32 %v60, %v268
  %v270 = vpop.f32.mrf.mxu0
  %v271 = vadd.f32 %v60, %v270
  %272 = vmatmul.bf16.gmra.mxu0 %v118
  %v273 = vpop.f32.mrf.mxu0
  %v274 = vadd.f32 %v60, %v273
  %v275 = vpop.f32.mrf.mxu0
  %v276 = vadd.f32 %v60, %v275
  %277 = vmatmul.bf16.gmra.mxu0 %v120
  %v278 = vpop.f32.mrf.mxu0
  %v279 = vadd.f32 %v60, %v278
  %v280 = vpop.f32.mrf.mxu0
  %v281 = vadd.f32 %v60, %v280
  %282 = vmatmul.bf16.gmra.mxu0 %v122
  %v283 = vpop.f32.mrf.mxu0
  %v284 = vadd.f32 %v60, %v283
  %v285 = vpop.f32.mrf.mxu0
  %v286 = vadd.f32 %v60, %v285
  %287 = vmatmul.bf16.gmra.mxu0 %v124
  %v288 = vpop.f32.mrf.mxu0
  %v289 = vadd.f32 %v60, %v288
  %v290 = vpop.f32.mrf.mxu0
  %v291 = vadd.f32 %v60, %v290
  %292 = vdwg.mxu0
  %293 = vmatpush.bf16.msra.mxu0 0
  %294 = vmatpush.bf16.msra.mxu0 0
  %295 = vmatpush.bf16.msra.mxu0 %v242
  %296 = vmatpush.bf16.msra.mxu0 %v200
  %297 = vmatpush.bf16.msra.mxu0 %v199
  %298 = vmatpush.bf16.msra.mxu0 %v198
  %299 = vmatpush.bf16.msra.mxu0 %v197
  %300 = vmatpush.bf16.msra.mxu0 %v196
  %301 = vmatmul.bf16.gmra.mxu0 %v217
  %v302 = vpop.f32.mrf.mxu0
  %v303 = vadd.f32 %v254, %v302
  %v304 = vpop.f32.mrf.mxu0
  %v305 = vadd.f32 %v256, %v304
  %306 = vmatmul.bf16.gmra.mxu0 %v220
  %v307 = vpop.f32.mrf.mxu0
  %v308 = vadd.f32 %v259, %v307
  %v309 = vpop.f32.mrf.mxu0
  %v310 = vadd.f32 %v261, %v309
  %311 = vmatmul.bf16.gmra.mxu0 %v223
  %v312 = vpop.f32.mrf.mxu0
  %v313 = vadd.f32 %v264, %v312
  %v314 = vpop.f32.mrf.mxu0
  %v315 = vadd.f32 %v266, %v314
  %316 = vmatmul.bf16.gmra.mxu0 %v226
  %v317 = vpop.f32.mrf.mxu0
  %v318 = vadd.f32 %v269, %v317
  %v319 = vpop.f32.mrf.mxu0
  %v320 = vadd.f32 %v271, %v319
  %321 = vmatmul.bf16.gmra.mxu0 %v229
  %v322 = vpop.f32.mrf.mxu0
  %v323 = vadd.f32 %v274, %v322
  %v324 = vpop.f32.mrf.mxu0
  %v325 = vadd.f32 %v276, %v324
  %326 = vmatmul.bf16.gmra.mxu0 %v232
  %v327 = vpop.f32.mrf.mxu0
  %v328 = vadd.f32 %v279, %v327
  %v329 = vpop.f32.mrf.mxu0
  %v330 = vadd.f32 %v281, %v329
  %331 = vmatmul.bf16.gmra.mxu0 %v235
  %v332 = vpop.f32.mrf.mxu0
  %v333 = vadd.f32 %v284, %v332
  %v334 = vpop.f32.mrf.mxu0
  %v335 = vadd.f32 %v286, %v334
  %336 = vmatmul.bf16.gmra.mxu0 %v238
  %v337 = vpop.f32.mrf.mxu0
  %v338 = vadd.f32 %v289, %v337
  %v339 = vpop.f32.mrf.mxu0
  %v340 = vadd.f32 %v291, %v339
  %341 = vdwg.mxu0
  %vm342 = vcmp.ge.f32.partialorder %v303, 0.0
  %vm343 = vcmp.ge.f32.partialorder %v305, 0.0
  %vm344 = vcmp.ge.f32.partialorder %v308, 0.0
  %vm345 = vcmp.ge.f32.partialorder %v310, 0.0
  %vm346 = vcmp.ge.f32.partialorder %v313, 0.0
  %vm347 = vcmp.ge.f32.partialorder %v315, 0.0
  %vm348 = vcmp.ge.f32.partialorder %v318, 0.0
  %vm349 = vcmp.ge.f32.partialorder %v320, 0.0
  %vm350 = vcmp.ge.f32.partialorder %v323, 0.0
  %vm351 = vcmp.ge.f32.partialorder %v325, 0.0
  %vm352 = vcmp.ge.f32.partialorder %v328, 0.0
  %vm353 = vcmp.ge.f32.partialorder %v330, 0.0
  %vm354 = vcmp.ge.f32.partialorder %v333, 0.0
  %vm355 = vcmp.ge.f32.partialorder %v335, 0.0
  %vm356 = vcmp.ge.f32.partialorder %v338, 0.0
  %vm357 = vcmp.ge.f32.partialorder %v340, 0.0
  %v358 = vmul.f32 %v303, 0.01
  %v359 = vmul.f32 %v305, 0.01
  %v360 = vmul.f32 %v308, 0.01
  %v361 = vmul.f32 %v310, 0.01
  %v362 = vmul.f32 %v313, 0.01
  %v363 = vmul.f32 %v315, 0.01
  %v364 = vmul.f32 %v318, 0.01
  %v365 = vmul.f32 %v320, 0.01
  %v366 = vmul.f32 %v323, 0.01
  %v367 = vmul.f32 %v325, 0.01
  %v368 = vmul.f32 %v328, 0.01
  %v369 = vmul.f32 %v330, 0.01
  %v370 = vmul.f32 %v333, 0.01
  %v371 = vmul.f32 %v335, 0.01
  %v372 = vmul.f32 %v338, 0.01
  %v373 = vmul.f32 %v340, 0.01
  %v374 = vsel %vm342, %v303, %v358
  %v375 = vsel %vm343, %v305, %v359
  %v376 = vsel %vm344, %v308, %v360
  %v377 = vsel %vm345, %v310, %v361
  %v378 = vsel %vm346, %v313, %v362
  %v379 = vsel %vm347, %v315, %v363
  %v380 = vsel %vm348, %v318, %v364
  %v381 = vsel %vm349, %v320, %v365
  %v382 = vsel %vm350, %v323, %v366
  %v383 = vsel %vm351, %v325, %v367
  %v384 = vsel %vm352, %v328, %v368
  %v385 = vsel %vm353, %v330, %v369
  %v386 = vsel %vm354, %v333, %v370
  %v387 = vsel %vm355, %v335, %v371
  %v388 = vsel %vm356, %v338, %v372
  %v389 = vsel %vm357, %v340, %v373
  %v390 = vpack.c.bf16 %v374, %v374
  %v391 = vpack.c.bf16 %v375, %v375
  %v392 = vpack.c.bf16 %v376, %v376
  %v393 = vpack.c.bf16 %v377, %v377
  %v394 = vpack.c.bf16 %v378, %v378
  %v395 = vpack.c.bf16 %v379, %v379
  %v396 = vpack.c.bf16 %v380, %v380
  %v397 = vpack.c.bf16 %v381, %v381
  %v398 = vpack.c.bf16 %v382, %v382
  %v399 = vpack.c.bf16 %v383, %v383
  %v400 = vpack.c.bf16 %v384, %v384
  %v401 = vpack.c.bf16 %v385, %v385
  %v402 = vpack.c.bf16 %v386, %v386
  %v403 = vpack.c.bf16 %v387, %v387
  %v404 = vpack.c.bf16 %v388, %v388
  %v405 = vpack.c.bf16 %v389, %v389
  %vm406 = vcmask 257024
  %407 = vst.msk [vmem:[%s3] sm:$0xf] %vm406, %v390
  %408 = vst.msk [vmem:[%s3 + $0x4] sm:$0xf] %vm406, %v391
  %409 = vst.msk [vmem:[%s3 + $0x8] sm:$0xf] %vm406, %v392
  %410 = vst.msk [vmem:[%s3 + $0xc] sm:$0xf] %vm406, %v393
  %411 = vst.msk [vmem:[%s3 + $0x10] sm:$0xf] %vm406, %v394
  %412 = vst.msk [vmem:[%s3 + $0x14] sm:$0xf] %vm406, %v395
  %413 = vst.msk [vmem:[%s3 + $0x18] sm:$0xf] %vm406, %v396
  %414 = vst.msk [vmem:[%s3 + $0x1c] sm:$0xf] %vm406, %v397
  %415 = vst.msk [vmem:[%s3 + $0x20] sm:$0xf] %vm406, %v398
  %416 = vst.msk [vmem:[%s3 + $0x24] sm:$0xf] %vm406, %v399
  %417 = vst.msk [vmem:[%s3 + $0x28] sm:$0xf] %vm406, %v400
  %418 = vst.msk [vmem:[%s3 + $0x2c] sm:$0xf] %vm406, %v401
  %419 = vst.msk [vmem:[%s3 + $0x30] sm:$0xf] %vm406, %v402
  %420 = vst.msk [vmem:[%s3 + $0x34] sm:$0xf] %vm406, %v403
  %421 = vst.msk [vmem:[%s3 + $0x38] sm:$0xf] %vm406, %v404
  %422 = vst.msk [vmem:[%s3 + $0x3c] sm:$0xf] %vm406, %v405
  // Predicated region
  $region14: #{tpu_custom_call.1} parent=0 // pred_check
    _
  $region15: #{tpu_custom_call.1} parent=0 // pred_check_branch
    %424 = sbr.rel (0) target = $region17
  $region16: #{tpu_custom_call.1} parent=0 // pred_region
    _
  $region17: #{tpu_custom_call.1} parent=0 // pred_fallthru
    _
  // Predicated region
  $region18: #{tpu_custom_call.1} parent=0 // pred_check
    _
  $region19: #{tpu_custom_call.1} parent=0 // pred_check_branch
    %426 = sbr.rel (0) target = $region21
  $region20: #{tpu_custom_call.1} parent=0 // pred_region
    _
  $region21: #{tpu_custom_call.1} parent=0 // pred_fallthru
    _

</llo_original>
